<compile_context>
chip_gen: v7x
topology: tpu7x:2x2x1
jax: 0.10.0
libtpu: 0.0.40
codegen_flags: <defaults>
</compile_context>

<pallas_src>
import jax
import jax.numpy as jnp
from jax.experimental import pallas as pl
from jax.experimental.pallas import tpu as pltpu

# ImageNet normalization constants (from the PyTorch module).
_MEAN = (0.485, 0.456, 0.406)
_STD = (0.229, 0.224, 0.225)
_INV_STD = tuple(1.0 / s for s in _STD)

# ~4 MiB logical per block: near the HBM roofline on v7x, fine on v6e/v5e
# given the explicit vmem_limit below.
_TARGET_BLOCK_BYTES = 4 * 1024 * 1024


def _choose_tiles(nc, l, itemsize, target_bytes=_TARGET_BLOCK_BYTES):
    """Pick (R, TILE_L) for a (nc, l) array.

    R must be a multiple of 8 or the full row extent; TILE_L must be a
    multiple of 128 or the full lane extent (Pallas masks ragged edge blocks).
    """
    # Lane (last) dim.
    if l <= 256:
        tile_l = l
    else:
        # Cap lanes so that at least 8 rows fit in the block budget.
        max_lanes = max(128, (target_bytes // (8 * itemsize)) // 128 * 128)
        tile_l = l if l <= max_lanes else max_lanes

    # Row (second-minor) dim.
    if nc <= 8:
        r = nc
    else:
        r = max(8, (target_bytes // (tile_l * itemsize)) // 8 * 8)
        r = min(r, ((nc + 7) // 8) * 8)

    # Keep >= 2 grid steps when the workload is big enough so that
    # dimension_semantics=("parallel", "parallel") can shard across both
    # TensorCores on v7x.
    if pl.cdiv(nc, r) * pl.cdiv(l, tile_l) < 2:
        if l >= 256 and tile_l == l:
            tile_l = ((tile_l // 2 + 127) // 128) * 128
        elif nc > 8:
            r = max(8, ((nc // 2 + 7) // 8) * 8)

    return int(r), int(tile_l)


def normalization_forward(img: jax.Array) -> jax.Array:
    """(img - mean) / std, per-channel, NCHW layout, C must be 3."""
    N, C, H, W = img.shape
    assert C == len(_MEAN), "channel dim must match mean/std length (3)"

    L = H * W
    NC = N * C
    out_dtype = jnp.promote_types(img.dtype, jnp.float32)
    in_bytes = jnp.dtype(img.dtype).itemsize
    out_bytes = jnp.dtype(out_dtype).itemsize
    itemsize = max(in_bytes, out_bytes)

    r, tile_l = _choose_tiles(NC, L, itemsize)

    # Flatten to 2D: rows = (n, c) pairs, lanes = spatial.  Free for
    # contiguous NCHW data.
    x = img.reshape(NC, L)

    def _normalize_kernel(x_ref, o_ref):
        # Global row index of each row in this block -> channel = row % 3.
        row0 = pl.program_id(0) * r
        rows = row0 + jax.lax.broadcasted_iota(jnp.int32, (r, 1), 0)
        ch = rows % 3
        mean = jnp.where(
            ch == 0,
            jnp.float32(_MEAN[0]),
            jnp.where(ch == 1, jnp.float32(_MEAN[1]), jnp.float32(_MEAN[2])),
        )
        inv_std = jnp.where(
            ch == 0,
            jnp.float32(_INV_STD[0]),
            jnp.where(ch == 1, jnp.float32(_INV_STD[1]), jnp.float32(_INV_STD[2])),
        )
        xv = x_ref[...].astype(jnp.float32)
        o_ref[...] = ((xv - mean) * inv_std).astype(o_ref.dtype)

    grid = (pl.cdiv(NC, r), pl.cdiv(L, tile_l))

    # Explicit scoped-VMEM request: in+out blocks, double-buffered, + slack.
    # Floor 32 MiB (safe on every generation), ceiling 48 MiB (headroom on
    # v7x's 64 MiB physical VMEM).
    block_elems = r * tile_l
    vmem_needed = 2 * block_elems * (in_bytes + out_bytes) + (2 << 20)
    vmem_limit = int(min(48 << 20, max(vmem_needed, 32 << 20)))

    cost = pl.CostEstimate(
        flops=2 * NC * L,
        transcendentals=0,
        bytes_accessed=NC * L * (in_bytes + out_bytes),
    )

    out = pl.pallas_call(
        _normalize_kernel,
        out_shape=jax.ShapeDtypeStruct((NC, L), out_dtype),
        grid=grid,
        in_specs=[pl.BlockSpec((r, tile_l), lambda i, j: (i, j))],
        out_specs=pl.BlockSpec((r, tile_l), lambda i, j: (i, j)),
        compiler_params=pltpu.CompilerParams(
            dimension_semantics=("parallel", "parallel"),
            vmem_limit_bytes=vmem_limit,
        ),
        cost_estimate=cost,
    )(x)

    return out.reshape(N, C, H, W)


normalization_forward_jit = jax.jit(normalization_forward)


if __name__ == "__main__":
    key = jax.random.PRNGKey(0)
    # Small NCHW image batch consistent with the module: C = 3 (RGB).
    img = jax.random.uniform(key, (2, 3, 16, 16), dtype=jnp.float32)

    out = normalization_forward_jit(img)
    jax.block_until_ready(out)

    # Reference check against plain JAX broadcasting (same semantics as torch).
    mean_ref = jnp.asarray(_MEAN, dtype=jnp.float32).reshape(1, 3, 1, 1)
    std_ref = jnp.asarray(_STD, dtype=jnp.float32).reshape(1, 3, 1, 1)
    ref = (img - mean_ref) / std_ref

    assert out.shape == img.shape
    assert out.dtype == ref.dtype
    assert jnp.allclose(out, ref, rtol=1e-5, atol=1e-6)

    print("KERNEL_OK")
</pallas_src>

<mosaic_0001>
module attributes {stable_mosaic.version = 11 : i64} {
  func.func @_normalize_kernel(%arg0: i32, %arg1: i32, %arg2: memref<6x128xf32, #tpu.memory_space<vmem>>, %arg3: memref<6x128xf32, #tpu.memory_space<vmem>>) attributes {dimension_semantics = [#tpu.dimension_semantics<parallel>, #tpu.dimension_semantics<parallel>], iteration_bounds = array<i64: 1, 2>, scalar_prefetch = 0 : i64, scratch_operands = 0 : i64, tpu.core_type = #tpu.core_type<tc>, window_params = [{transform_indices = @transform_0, window_bounds = array<i64: 6, 128>}, {transform_indices = @transform_1, window_bounds = array<i64: 6, 128>}]} {
    %c6_i32 = arith.constant 6 : i32
    %0 = arith.muli %arg0, %c6_i32 : i32
    %1 = tpu.iota {dimensions = array<i32: 0>} : vector<6x1xi32>
    %2 = vector.broadcast %0 : i32 to vector<6x1xi32>
    %3 = arith.addi %2, %1 : vector<6x1xi32>
    %c3_i32 = arith.constant 3 : i32
    %c0_i32 = arith.constant 0 : i32
    %4 = arith.cmpi eq, %c3_i32, %c0_i32 : i32
    %c1_i32 = arith.constant 1 : i32
    %5 = arith.select %4, %c1_i32, %c3_i32 : i32
    %6 = vector.broadcast %5 : i32 to vector<6x1xi32>
    %7 = arith.remsi %3, %6 : vector<6x1xi32>
    %c0_i32_0 = arith.constant 0 : i32
    %8 = vector.broadcast %c0_i32_0 : i32 to vector<6x1xi32>
    %9 = arith.cmpi ne, %7, %8 : vector<6x1xi32>
    %c0_i32_1 = arith.constant 0 : i32
    %10 = vector.broadcast %c0_i32_1 : i32 to vector<6x1xi32>
    %11 = arith.cmpi slt, %7, %10 : vector<6x1xi32>
    %c0_i32_2 = arith.constant 0 : i32
    %12 = arith.cmpi slt, %5, %c0_i32_2 : i32
    %13 = vector.broadcast %12 : i1 to vector<6x1xi1>
    %14 = vector.broadcast %13 : vector<6x1xi1> to vector<6x1xi1>
    %15 = arith.xori %11, %14 : vector<6x1xi1>
    %16 = arith.andi %15, %9 : vector<6x1xi1>
    %17 = vector.broadcast %5 : i32 to vector<6x1xi32>
    %18 = arith.addi %7, %17 : vector<6x1xi32>
    %19 = arith.select %16, %18, %7 : vector<6x1xi1>, vector<6x1xi32>
    %c0_i32_3 = arith.constant 0 : i32
    %20 = vector.broadcast %c0_i32_3 : i32 to vector<6x1xi32>
    %21 = arith.cmpi eq, %19, %20 : vector<6x1xi32>
    %c1_i32_4 = arith.constant 1 : i32
    %22 = vector.broadcast %c1_i32_4 : i32 to vector<6x1xi32>
    %23 = arith.cmpi eq, %19, %22 : vector<6x1xi32>
    %cst = arith.constant 4.560000e-01 : f32
    %cst_5 = arith.constant 4.060000e-01 : f32
    %24 = vector.broadcast %cst : f32 to vector<6x1xf32>
    %25 = vector.broadcast %cst_5 : f32 to vector<6x1xf32>
    %26 = arith.select %23, %24, %25 : vector<6x1xi1>, vector<6x1xf32>
    %cst_6 = arith.constant 4.850000e-01 : f32
    %27 = vector.broadcast %cst_6 : f32 to vector<6x1xf32>
    %28 = arith.select %21, %27, %26 : vector<6x1xi1>, vector<6x1xf32>
    %c0_i32_7 = arith.constant 0 : i32
    %29 = vector.broadcast %c0_i32_7 : i32 to vector<6x1xi32>
    %30 = arith.cmpi eq, %19, %29 : vector<6x1xi32>
    %c1_i32_8 = arith.constant 1 : i32
    %31 = vector.broadcast %c1_i32_8 : i32 to vector<6x1xi32>
    %32 = arith.cmpi eq, %19, %31 : vector<6x1xi32>
    %cst_9 = arith.constant 4.46428585 : f32
    %cst_10 = arith.constant 4.44444466 : f32
    %33 = vector.broadcast %cst_9 : f32 to vector<6x1xf32>
    %34 = vector.broadcast %cst_10 : f32 to vector<6x1xf32>
    %35 = arith.select %32, %33, %34 : vector<6x1xi1>, vector<6x1xf32>
    %cst_11 = arith.constant 4.36681223 : f32
    %36 = vector.broadcast %cst_11 : f32 to vector<6x1xf32>
    %37 = arith.select %30, %36, %35 : vector<6x1xi1>, vector<6x1xf32>
    %c0 = arith.constant 0 : index
    %c0_12 = arith.constant 0 : index
    %38 = vector.load %arg2[%c0, %c0_12] : memref<6x128xf32, #tpu.memory_space<vmem>>, vector<6x128xf32>
    %39 = vector.broadcast %28 : vector<6x1xf32> to vector<6x128xf32>
    %40 = arith.subf %38, %39 : vector<6x128xf32>
    %41 = vector.broadcast %37 : vector<6x1xf32> to vector<6x128xf32>
    %42 = arith.mulf %40, %41 : vector<6x128xf32>
    %c0_13 = arith.constant 0 : index
    %c0_14 = arith.constant 0 : index
    %43 = vector.load %arg3[%c0_13, %c0_14] : memref<6x128xf32, #tpu.memory_space<vmem>>, vector<6x128xf32>
    tpu.vector_store %arg3[%c0_13, %c0_14], %42 {strides = array<i32>} : memref<6x128xf32, #tpu.memory_space<vmem>>, vector<6x128xf32>,
    return
  }
  func.func @transform_0(%arg0: i32, %arg1: i32) -> (i32, i32) {
    %c0_i32 = arith.constant 0 : i32
    return %arg0, %arg1 : i32, i32
  }
  func.func @transform_1(%arg0: i32, %arg1: i32) -> (i32, i32) {
    %c0_i32 = arith.constant 0 : i32
    return %arg0, %arg1 : i32, i32
  }
}

</mosaic_0001>

<llo_original>
// kernel: normalization_forward.1
$region0: #{normalization_forward.1}
  #allocation0 [shape = 'u32[]', space=smem, size = 0x4, offset = 0x4, fixed_abs, tag = 'smem constant byte address 0x4 - core index']
  #allocation1 [shape = 'u32[144,128]{1,0:T(1,128)}', space=vmem, size = 0x12000, scoped, tag = 'internal scratch']
  %s0 = inlined_call_operand.vmem [shape: f32[6,256], index: 0, kind: input, shape index: {}]
  %s1 = inlined_call_operand.vmem [shape: f32[6,256], index: 1, kind: output, shape index: {}]
  %s2 = sld [smem:[#allocation0]]
  $region37: #{normalization_forward.1} parent=0
    _
  %s4 = ssub.s32 1, %s2
  %s5 = scalar_select 0, %s4, %s2
  loop: start=0, step=1, limit=4
  $region2: #{normalization_forward.1} parent=0 // loop_pre_header
    _
  $region3: #{normalization_forward.1} parent=0 // loop_header
    %s7 = sphi 0, %s11
    %p8 = scmp.ge.s32.totalorder %s7, 4
    %s14 = sphi 0, %s26
    %s15 = sphi 0, %s22
    %s16 = sphi 0, %s14
    %s17 = sphi 0, %s15
    %s18 = sphi 0, %s16
    %s19 = sphi 0, %s17
    %s31 = sphi 0, %s33
    %s34 = sphi 0, %s31
    %s35 = sphi 0, %s34
    %s51 = sphi 0, %s35
    %s59 = sphi 0, %s61
    %s62 = sphi 0, %s59
    %s63 = sphi 0, %s62
    %s79 = sphi 0, %s63
  $region4: #{normalization_forward.1} parent=0 // loop_header_branch
    %10 = sbr.rel (%p8) target = $region8
  $region5: #{normalization_forward.1} parent=0 // loop_body
    %s12 = ssub.s32 %s7, 1
    %s13 = ssub.s32 %s7, 2
    %s20 = sadd.s32 1, %s15
    %p21 = scmp.ge.s32.totalorder %s20, 2
    %s22 = scalar_select %p21, 0, %s20
    %s23 = sadd.s32 1, %s14
    %s24 = scalar_select %p21, %s23, %s14
    %p25 = scmp.ge.s32.totalorder %s24, 1
    %s26 = scalar_select %p25, 0, %s24
    %s27 = ssub.s32 %s14, %s26
    %s28 = ssub.s32 %s15, %s22
    %s29 = sor.u32 %s27, %s28
    %p30 = scmp.eq.s32.totalorder %s29, 0
    %s32 = sadd.s32 %s31, 1
    %s33 = scalar_select %p30, %s31, %s32
    %p36 = pneg %p30
    %p37 = scmp.eq.s32.totalorder %s7, 1
    %p38 = por %p36, %p37
    %p39 = scmp.ne.s32.totalorder %s31, %s34
    %p40 = scmp.eq.s32.totalorder %s7, 0
    %p41 = por %p39, %p40
    %p42 = scmp.ne.s32.totalorder %s31, %s34
    %p43 = scmp.eq.s32.totalorder %s12, 1
    %p44 = por %p42, %p43
    %p45 = scmp.ne.s32.totalorder %s34, %s35
    %p46 = scmp.eq.s32.totalorder %s12, 0
    %p47 = por %p45, %p46
    %p48 = scmp.ne.s32.totalorder %s34, %s35
    %p49 = scmp.eq.s32.totalorder %s13, 1
    %p50 = por %p48, %p49
    %p52 = scmp.ne.s32.totalorder %s35, %s51
    %p53 = scmp.eq.s32.totalorder %s13, 0
    %p54 = por %p52, %p53
    %s55 = ssub.s32 %s14, %s26
    %s56 = ssub.s32 %s15, %s22
    %s57 = sor.u32 %s55, %s56
    %p58 = scmp.eq.s32.totalorder %s57, 0
    %s60 = sadd.s32 %s59, 1
    %s61 = scalar_select %p58, %s59, %s60
    %p64 = pneg %p58
    %p65 = scmp.eq.s32.totalorder %s7, 1
    %p66 = por %p64, %p65
    %p67 = scmp.ne.s32.totalorder %s59, %s62
    %p68 = scmp.eq.s32.totalorder %s7, 0
    %p69 = por %p67, %p68
    %p70 = scmp.ne.s32.totalorder %s59, %s62
    %p71 = scmp.eq.s32.totalorder %s12, 1
    %p72 = por %p70, %p71
    %p73 = scmp.ne.s32.totalorder %s62, %s63
    %p74 = scmp.eq.s32.totalorder %s12, 0
    %p75 = por %p73, %p74
    %p76 = scmp.ne.s32.totalorder %s62, %s63
    %p77 = scmp.eq.s32.totalorder %s13, 1
    %p78 = por %p76, %p77
    %p80 = scmp.ne.s32.totalorder %s63, %s79
    %p81 = scmp.eq.s32.totalorder %s13, 0
    %p82 = por %p80, %p81
    %p83 = scmp.le.s32.totalorder 1, %s7
    %p84 = scmp.lt.s32.totalorder %s7, 3
    %p85 = pnand %p83, %p84
    %p86 = pneg %p85
    // Predicated region
    $region9: #{normalization_forward.1} parent=5 // pred_check
      _
    $region10: #{normalization_forward.1} parent=5 // pred_check_branch
      %88 = sbr.rel (%p85) target = $region12
    $region11: #{normalization_forward.1} parent=5 // pred_region
      %s89 = ssub.s32 %s7, 1
    $region12: #{normalization_forward.1} parent=5 // pred_fallthru
      _
    %p90 = scmp.lt.s32.totalorder %s7, 2
    // Predicated region
    $region13: #{normalization_forward.1} parent=5 // pred_check
      %p91 = pneg %p90
    $region14: #{normalization_forward.1} parent=5 // pred_check_branch
      %93 = sbr.rel (%p91) target = $region16
    $region15: #{normalization_forward.1} parent=5 // pred_region
      // Predicated region
      $region17: #{normalization_forward.1} parent=15 // pred_check
        %p94 = pneg %p41
      $region18: #{normalization_forward.1} parent=15 // pred_check_branch
        %96 = sbr.rel (%p94) target = $region20
      $region19: #{normalization_forward.1} parent=15 // pred_region
        %p97 = scmp.lt.s32.totalorder %s14, 0
        %s98 = scalar_select %p97, %s14, 0
        %p99 = scmp.lt.s32.totalorder %s15, 1
        %s100 = scalar_select %p99, %s15, 1
        %s101 = smul.addr %s98, 2
        %s102 = sadd.s32 %s100, %s101
        %s103 = smul.addr %s102, 8
        %s104 = scalar_lea.vmem %s0, %s103
      $region20: #{normalization_forward.1} parent=15 // pred_fallthru
        _
    $region16: #{normalization_forward.1} parent=5 // pred_fallthru
      _
    %p105 = scmp.le.s32.totalorder 1, %s7
    %p106 = scmp.lt.s32.totalorder %s7, 3
    %p107 = pnand %p105, %p106
    %p108 = pneg %p107
    // Predicated region
    $region21: #{normalization_forward.1} parent=5 // pred_check
      _
    $region22: #{normalization_forward.1} parent=5 // pred_check_branch
      %110 = sbr.rel (%p107) target = $region24
    $region23: #{normalization_forward.1} parent=5 // pred_region
      %s111 = ssub.s32 %s7, 1
      %p112 = scmp.lt.s32.totalorder %s16, 0
      %s113 = scalar_select %p112, %s16, 0
      %p114 = scmp.lt.s32.totalorder %s17, 1
      %s115 = scalar_select %p114, %s17, 1
      %s116 = smul.addr %s113, 2
      %s117 = sadd.s32 %s115, %s116
      %s118 = smul.addr %s117, 8
      %s119 = scalar_lea.vmem %s0, %s118
      %p120 = pneg %p47
      %p121 = pneg %p44
      %p122 = pneg %p75
      %p123 = pneg %p72
      %p124 = scmp.lt.s32.totalorder %s16, 0
      %s125 = scalar_select %p124, %s16, 0
      %p126 = scmp.lt.s32.totalorder %s17, 1
      %s127 = scalar_select %p126, %s17, 1
      %s128 = smul.addr %s125, 2
      %s129 = sadd.s32 %s127, %s128
      %s130 = smul.addr %s129, 8
      %s131 = scalar_lea.vmem %s1, %s130
      %p132 = scmp.lt.s32.totalorder %s16, 0
      %s133 = scalar_select %p132, %s16, 0
      %p134 = scmp.lt.s32.totalorder %s17, 1
      %s135 = scalar_select %p134, %s17, 1
      %s136 = smul.addr %s133, 2
      %s137 = sadd.s32 %s135, %s136
      %s138 = smul.addr %s137, 8
      %s139 = scalar_lea.vmem %s0, %s138
      %p140 = scmp.lt.s32.totalorder %s16, 0
      %s141 = scalar_select %p140, %s16, 0
      %p142 = scmp.lt.s32.totalorder %s17, 1
      %s143 = scalar_select %p142, %s17, 1
      %s144 = smul.addr %s141, 2
      %s145 = sadd.s32 %s143, %s144
      %s146 = smul.addr %s145, 8
      %s147 = scalar_lea.vmem %s1, %s146
      %s148 = smul.u32 %s16, 6
      %v149 = vlaneseq
      %v150 = vshrl.u32 %v149, 7
      %v151 = vstv %s148
      %v152 = vadd.s32 %v151, %v150
      %vm153 = vcmp.lt.s32.totalorder %v152, 0
      %v154 = vsub.s32 0, %v152
      %v155 = vsel %vm153, %v154, %v152
      %v156 = vmul.u32.u64.compose %v155, 2863311531
      %v157 = vextract.low.u32 %v156
      %v158 = vextract.high.u32 %v156
      %v159 = vshrl.u32 %v158, 1
      %v160 = vmul.u32 %v159, 3
      %v161 = vsub.s32 %v155, %v160
      %v162 = vsub.s32 0, %v161
      %v163 = vsel %vm153, %v162, %v161
      %vm164 = vcmp.ne.s32.totalorder %v163, 0
      %vm165 = vcmp.lt.s32.totalorder %v163, 0
      %vm166 = vmand %vm165, %vm164
      %v167 = vadd.s32 %v163, 3
      %v168 = vsel %vm166, %v167, %v163
      %vm169 = vcmp.eq.s32.totalorder %v168, 0
      %vm170 = vcmp.eq.s32.totalorder %v168, 1
      %v171 = vsel %vm170, 0.456, 0.406
      %v172 = vsel %vm169, 0.485, %v171
      %v173 = vsel %vm170, 4.464286, 4.4444447
      %v174 = vsel %vm169, 4.366812, %v173
      %v175 = vld [vmem:[%s139] sm:$0x3f]
      %v176 = vsub.f32 %v175, %v172
      %v177 = vmul.f32 %v176, %v174
      %178 = vst [vmem:[%s147] sm:$0x3f] %v177
      %p179 = scmp.lt.s32.totalorder %s16, 0
      %s180 = scalar_select %p179, %s16, 0
      %p181 = scmp.lt.s32.totalorder %s17, 1
      %s182 = scalar_select %p181, %s17, 1
      %s183 = smul.addr %s180, 2
      %s184 = sadd.s32 %s182, %s183
      %s185 = smul.addr %s184, 8
      %s186 = scalar_lea.vmem %s1, %s185
      // Predicated region
      $region25: #{normalization_forward.1} parent=23 // pred_check
        %p187 = pneg %p72
      $region26: #{normalization_forward.1} parent=23 // pred_check_branch
        %189 = sbr.rel (%p187) target = $region28
      $region27: #{normalization_forward.1} parent=23 // pred_region
        _
      $region28: #{normalization_forward.1} parent=23 // pred_fallthru
        _
    $region24: #{normalization_forward.1} parent=5 // pred_fallthru
      _
    %p190 = scmp.le.s32.totalorder 2, %s7
    // Predicated region
    $region29: #{normalization_forward.1} parent=5 // pred_check
      %p191 = pneg %p190
    $region30: #{normalization_forward.1} parent=5 // pred_check_branch
      %193 = sbr.rel (%p191) target = $region32
    $region31: #{normalization_forward.1} parent=5 // pred_region
      %s194 = ssub.s32 %s7, 2
      // Predicated region
      $region33: #{normalization_forward.1} parent=31 // pred_check
        %p195 = pneg %p78
      $region34: #{normalization_forward.1} parent=31 // pred_check_branch
        %197 = sbr.rel (%p195) target = $region36
      $region35: #{normalization_forward.1} parent=31 // pred_region
        %p198 = scmp.lt.s32.totalorder %s18, 0
        %s199 = scalar_select %p198, %s18, 0
        %p200 = scmp.lt.s32.totalorder %s19, 1
        %s201 = scalar_select %p200, %s19, 1
        %s202 = smul.addr %s199, 2
        %s203 = sadd.s32 %s201, %s202
        %s204 = smul.addr %s203, 8
        %s205 = scalar_lea.vmem %s1, %s204
      $region36: #{normalization_forward.1} parent=31 // pred_fallthru
        _
    $region32: #{normalization_forward.1} parent=5 // pred_fallthru
      _
  $region6: #{normalization_forward.1} parent=0 // loop_footer
    %s11 = sadd.s32 1, %s7
  $region7: #{normalization_forward.1} parent=0 // loop_footer_branch
    %6 = sbr.rel target = $region3
  $region8: #{normalization_forward.1} parent=0 // loop_exit
    _

</llo_original>
